<compile_context>
chip_gen: v5e
topology: v5e:2x2
jax: 0.10.0
libtpu: 0.0.40
codegen_flags: <defaults>
</compile_context>

<pallas_src>
import math
import numpy as np
import jax
import jax.numpy as jnp
from jax.experimental import pallas as pl
from jax.experimental.pallas import tpu as pltpu

# ----- KANLinear hyper-parameters (defaults of the PyTorch module) -----
GRID_SIZE = 5
SPLINE_ORDER = 3
GRID_RANGE = (-1.0, 1.0)
N_COEF = GRID_SIZE + SPLINE_ORDER            # 8 spline coeffs per input feature
N_KNOTS = GRID_SIZE + 2 * SPLINE_ORDER + 1   # 12 knots per input feature
N_PAIRS = sum(N_KNOTS - 1 - k for k in range(1, SPLINE_ORDER + 1))   # 27 (k,j) pairs


# ---------------- Pallas kernel: uniform-grid fast path ----------------
def _make_uniform_kernel(knots, mxu_dtype):
    """Kernel specialized for a shared, uniformly spaced knot vector (default init).

    knots: tuple of N_KNOTS Python floats (same for every input feature).
    """
    g = [float(v) for v in knots]
    h = (g[-1] - g[0]) / (N_KNOTS - 1)       # uniform spacing  ->  g[j+k]-g[j] == k*h

    def kernel(xt_ref, w_ref, ot_ref):
        # xt_ref: (IN, TB)              f32  input tile, transposed (lane axis = batch)
        # w_ref:  (OUT, IN*(N_COEF+1))  mxu_dtype  fused [base_weight | scaled spline w]
        # ot_ref: (OUT, TB)             f32  output tile, transposed
        x = xt_ref[...]                                   # (IN, TB) f32
        in_f = x.shape[0]

        # ---- base path activation: SiLU (f32 on VPU/EUP) ----
        silu = x * jax.nn.sigmoid(x)

        # ---- stacked numerators: rows [j*IN,(j+1)*IN) = x - g[j]  (scalar subs) ----
        dx = jnp.concatenate([x - g[j] for j in range(N_KNOTS)], axis=0)   # (12*IN, TB)

        # ---- order-0 bases: indicator[g_j <= x < g_{j+1}] = (x>=g_j) - (x>=g_{j+1})
        #      (knots strictly increasing on this path) — 1 compare + 1 sub on slabs ----
        ge = (dx >= 0.0).astype(jnp.float32)                               # (12*IN, TB)
        b = ge[: (N_KNOTS - 1) * in_f] - ge[in_f:]                         # (11*IN, TB)

        # ---- stacked Cox-de Boor: one scalar reciprocal per level (uniform spacing),
        #      each level ~4 full-width VPU ops, all slices 16-row aligned ----
        for k in range(1, SPLINE_ORDER + 1):
            n = (N_KNOTS - 1 - k) * in_f
            inv = 1.0 / (k * h)                       # == 1/(g[j+k]-g[j]) for every j
            b = inv * (dx[:n] * b[:n]
                       - dx[(k + 1) * in_f:(k + 1) * in_f + n] * b[in_f:in_f + n])
        # b: (N_COEF*IN, TB), coef-major — already contiguous for the fused matmul.

        # ---- fused K = IN*(N_COEF+1) slab; pieces cast BEFORE concat ----
        slab = jnp.concatenate([silu.astype(mxu_dtype), b.astype(mxu_dtype)], axis=0)

        # ---- single MXU call: (OUT, K) @ (K, TB) -> (OUT, TB), f32 accumulation ----
        ot_ref[...] = jnp.dot(w_ref[...], slab,
                              preferred_element_type=jnp.float32).astype(ot_ref.dtype)

    return kernel


# ------------- Pallas kernel: general per-feature-grid fallback -------------
def kan_linear_general_kernel(xt_ref, grid_ref, invl_ref, ninvr_ref, w_ref, ot_ref):
    # xt_ref:    (IN, TB)              f32  input tile, transposed
    # grid_ref:  (IN, N_KNOTS)         f32  per-feature knot grid
    # invl_ref:  (IN, N_PAIRS)         f32   1/(g[:,j+k]   - g[:,j])    (0 if span == 0)
    # ninvr_ref: (IN, N_PAIRS)         f32  -1/(g[:,j+k+1] - g[:,j+1])  (0 if span == 0)
    # w_ref:     (OUT, IN*(N_COEF+1))  mxu_dtype fused weight
    # ot_ref:    (OUT, TB)             f32  output tile, transposed
    x = xt_ref[...]
    g = grid_ref[...]
    invl = invl_ref[...]
    ninvr = ninvr_ref[...]

    silu = x * jax.nn.sigmoid(x)

    # hoisted numerators dx[j] = x - g[:, j]
    dx = [x - g[:, j:j + 1] for j in range(N_KNOTS)]

    # order-0 via ge[j] & ~ge[j+1] (12 compares instead of 22; exact equivalence)
    ge = [d >= 0.0 for d in dx]
    bases = [jnp.logical_and(ge[j], jnp.logical_not(ge[j + 1])).astype(jnp.float32)
             for j in range(N_KNOTS - 1)]

    # Cox-de Boor with precomputed (clamped) reciprocal denominators
    p = 0
    for k in range(1, SPLINE_ORDER + 1):
        new_bases = []
        for j in range(len(bases) - 1):
            left = dx[j] * invl[:, p:p + 1]
            right = dx[j + k + 1] * ninvr[:, p:p + 1]
            new_bases.append(left * bases[j] + right * bases[j + 1])
            p += 1
        bases = new_bases

    slab = jnp.concatenate([silu.astype(w_ref.dtype)]
                           + [b.astype(w_ref.dtype) for b in bases], axis=0)
    ot_ref[...] = jnp.dot(w_ref[...], slab,
                          preferred_element_type=jnp.float32).astype(ot_ref.dtype)


# --------------------------------- wrapper ----------------------------------
def kan_linear(x, grid, base_weight, spline_weight, spline_scaler, *,
               tile_b=128, mxu_dtype=jnp.bfloat16):
    """KANLinear.forward.  mxu_dtype=jnp.float32 gives a full-precision MXU path."""
    B, IN = x.shape
    OUT = base_weight.shape[0]
    assert spline_weight.shape == (OUT, IN, N_COEF)
    assert grid.shape == (IN, N_KNOTS)
    tile_b = min(tile_b, B)
    assert B % tile_b == 0

    # ---- fused weight (OUT, IN*(C+1)): [base_weight | coef-major scaled spline w] ----
    scaled = spline_weight * spline_scaler[:, :, None]                    # (OUT, IN, C)
    spline_cm = jnp.transpose(scaled, (0, 2, 1)).reshape(OUT, N_COEF * IN)
    w_comb = jnp.concatenate([base_weight, spline_cm], axis=1).astype(mxu_dtype)

    K = IN * (N_COEF + 1)
    x_t = x.T                                                             # (IN, B)

    cost = pl.CostEstimate(
        flops=2 * B * OUT * K,
        transcendentals=B * IN,
        bytes_accessed=4 * B * (IN + OUT) + jnp.dtype(mxu_dtype).itemsize * OUT * K,
    )
    cparams = pltpu.CompilerParams(dimension_semantics=("parallel",))

    # ---- uniform-grid fast-path detection (concrete grid only; tracers -> general) ----
    uniform, knots = False, None
    try:
        g_np = np.asarray(grid, dtype=np.float64)
        if np.array_equal(g_np, np.broadcast_to(g_np[0:1], g_np.shape)):
            sp = np.diff(g_np[0])
            if sp.size > 0 and sp[0] > 0 and np.allclose(sp, sp.mean(),
                                                         rtol=1e-5, atol=1e-7):
                uniform, knots = True, tuple(float(v) for v in g_np[0])
    except Exception:   # grid is a tracer (called under jit with a traced grid)
        uniform = False

    if uniform:
        out_t = pl.pallas_call(
            _make_uniform_kernel(knots, mxu_dtype),
            out_shape=jax.ShapeDtypeStruct((OUT, B), x.dtype),
            grid=(B // tile_b,),
            in_specs=[
                pl.BlockSpec((IN, tile_b), lambda i: (0, i)),
                pl.BlockSpec((OUT, K), lambda i: (0, 0)),
            ],
            out_specs=pl.BlockSpec((OUT, tile_b), lambda i: (0, i)),
            compiler_params=cparams,
            cost_estimate=cost,
        )(x_t, w_comb)
    else:
        # precomputed reciprocal denominators (per-feature); zero-length spans -> 0
        def safe_recip(d):
            nz = d != 0
            return jnp.where(nz, 1.0 / jnp.where(nz, d, 1.0), 0.0)

        pairs = [(k, j) for k in range(1, SPLINE_ORDER + 1)
                 for j in range(N_KNOTS - 1 - k)]
        invl = jnp.stack([safe_recip(grid[:, j + k] - grid[:, j]) for k, j in pairs],
                         axis=1)
        ninvr = jnp.stack([-safe_recip(grid[:, j + k + 1] - grid[:, j + 1])
                           for k, j in pairs], axis=1)

        out_t = pl.pallas_call(
            kan_linear_general_kernel,
            out_shape=jax.ShapeDtypeStruct((OUT, B), x.dtype),
            grid=(B // tile_b,),
            in_specs=[
                pl.BlockSpec((IN, tile_b), lambda i: (0, i)),
                pl.BlockSpec((IN, N_KNOTS), lambda i: (0, 0)),
                pl.BlockSpec((IN, N_PAIRS), lambda i: (0, 0)),
                pl.BlockSpec((IN, N_PAIRS), lambda i: (0, 0)),
                pl.BlockSpec((OUT, K), lambda i: (0, 0)),
            ],
            out_specs=pl.BlockSpec((OUT, tile_b), lambda i: (0, i)),
            compiler_params=cparams,
            cost_estimate=cost,
        )(x_t, grid, invl, ninvr, w_comb)

    return out_t.T                                                        # (B, OUT)


# --------------------------- pure-JAX reference -----------------------------
def b_splines_ref(x, grid):
    xg = x[:, :, None]                                       # (B, IN, 1)
    bases = jnp.logical_and(xg >= grid[:, :-1], xg < grid[:, 1:]).astype(x.dtype)
    for k in range(1, SPLINE_ORDER + 1):
        bases = ((xg - grid[:, :-(k + 1)]) / (grid[:, k:-1] - grid[:, :-(k + 1)])
                 * bases[:, :, :-1]
                 + (grid[:, k + 1:] - xg) / (grid[:, k + 1:] - grid[:, 1:-k])
                 * bases[:, :, 1:])
    return bases                                             # (B, IN, N_COEF)


def kan_linear_ref(x, grid, base_weight, spline_weight, spline_scaler):
    B = x.shape[0]
    out_f = base_weight.shape[0]
    silu = x * jax.nn.sigmoid(x)
    base_out = silu @ base_weight.T
    bases = b_splines_ref(x, grid)
    scaled = spline_weight * spline_scaler[:, :, None]
    spline_out = bases.reshape(B, -1) @ scaled.reshape(out_f, -1).T
    return base_out + spline_out


# --------------------------------- main -------------------------------------
if __name__ == "__main__":
    B, IN_F, OUT_F = 256, 16, 128

    # knot grid buffer: exactly as in KANLinear.__init__ (uniform, shared across features)
    h = (GRID_RANGE[1] - GRID_RANGE[0]) / GRID_SIZE
    grid_1d = (jnp.arange(-SPLINE_ORDER, GRID_SIZE + SPLINE_ORDER + 1,
                          dtype=jnp.float32) * h + GRID_RANGE[0])      # (N_KNOTS,)
    grid = jnp.broadcast_to(grid_1d, (IN_F, N_KNOTS))                  # (IN, N_KNOTS)

    # deterministic synthetic parameters (shapes match the PyTorch module)
    key = jax.random.PRNGKey(0)
    k_x, k_bw, k_sw, k_ss = jax.random.split(key, 4)
    bound = 1.0 / math.sqrt(IN_F)
    base_weight = jax.random.uniform(k_bw, (OUT_F, IN_F), jnp.float32,
                                     minval=-bound, maxval=bound)
    spline_weight = 0.1 * jax.random.normal(k_sw, (OUT_F, IN_F, N_COEF), jnp.float32)
    spline_scaler = jax.random.uniform(k_ss, (OUT_F, IN_F), jnp.float32,
                                       minval=-bound, maxval=bound)
    x = 0.5 * jax.random.normal(k_x, (B, IN_F), jnp.float32)

    # --- 1) uniform-grid fast path (default init), bf16 MXU operands ---
    out = jax.block_until_ready(
        kan_linear(x, grid, base_weight, spline_weight, spline_scaler))
    ref = kan_linear_ref(x, grid, base_weight, spline_weight, spline_scaler)
    assert out.shape == (B, OUT_F)
    assert jnp.allclose(out, ref, rtol=2e-2, atol=2e-2), "uniform/bf16 mismatch"

    # --- 2) precision knob: f32 MXU path (tighter tolerance) ---
    out32 = jax.block_until_ready(
        kan_linear(x, grid, base_weight, spline_weight, spline_scaler,
                   mxu_dtype=jnp.float32))
    assert jnp.allclose(out32, ref, rtol=5e-3, atol=5e-3), "uniform/f32 mismatch"

    # --- 3) per-feature (non-uniform) grid -> general fallback kernel ---
    grid_pf = grid * (1.0 + 0.1 * jnp.arange(IN_F, dtype=jnp.float32)[:, None] / IN_F)
    out_pf = jax.block_until_ready(
        kan_linear(x, grid_pf, base_weight, spline_weight, spline_scaler))
    ref_pf = kan_linear_ref(x, grid_pf, base_weight, spline_weight, spline_scaler)
    assert jnp.allclose(out_pf, ref_pf, rtol=2e-2, atol=2e-2), "per-feature mismatch"

    print("KERNEL_OK")
</pallas_src>

<mosaic_0001>
module attributes {stable_mosaic.version = 11 : i64} {
  func.func @kernel(%arg0: i32, %arg1: memref<16x128xf32, #tpu.memory_space<vmem>>, %arg2: memref<128x144xbf16, #tpu.memory_space<vmem>>, %arg3: memref<128x128xf32, #tpu.memory_space<vmem>>) attributes {dimension_semantics = [#tpu.dimension_semantics<parallel>], iteration_bounds = array<i64: 2>, scalar_prefetch = 0 : i64, scratch_operands = 0 : i64, tpu.core_type = #tpu.core_type<tc>, window_params = [{transform_indices = @transform_0, window_bounds = array<i64: 16, 128>}, {pipeline_mode = #tpu.pipeline_mode<synchronous>, transform_indices = @transform_1, window_bounds = array<i64: 128, 144>}, {transform_indices = @transform_2, window_bounds = array<i64: 128, 128>}]} {
    %c0 = arith.constant 0 : index
    %c0_0 = arith.constant 0 : index
    %0 = vector.load %arg1[%c0, %c0_0] : memref<16x128xf32, #tpu.memory_space<vmem>>, vector<16x128xf32>
    %1 = arith.negf %0 : vector<16x128xf32>
    %2 = math.exp %1 : vector<16x128xf32>
    %cst = arith.constant 1.000000e+00 : f32
    %3 = vector.broadcast %cst : f32 to vector<16x128xf32>
    %4 = arith.addf %3, %2 : vector<16x128xf32>
    %5 = arith.divf %3, %4 : vector<16x128xf32>
    %6 = arith.mulf %0, %5 : vector<16x128xf32>
    %cst_1 = arith.constant -2.200000e+00 : f32
    %7 = vector.broadcast %cst_1 : f32 to vector<16x128xf32>
    %8 = arith.subf %0, %7 : vector<16x128xf32>
    %cst_2 = arith.constant -1.800000e+00 : f32
    %9 = vector.broadcast %cst_2 : f32 to vector<16x128xf32>
    %10 = arith.subf %0, %9 : vector<16x128xf32>
    %cst_3 = arith.constant -1.400000e+00 : f32
    %11 = vector.broadcast %cst_3 : f32 to vector<16x128xf32>
    %12 = arith.subf %0, %11 : vector<16x128xf32>
    %cst_4 = arith.constant -1.000000e+00 : f32
    %13 = vector.broadcast %cst_4 : f32 to vector<16x128xf32>
    %14 = arith.subf %0, %13 : vector<16x128xf32>
    %cst_5 = arith.constant -6.000000e-01 : f32
    %15 = vector.broadcast %cst_5 : f32 to vector<16x128xf32>
    %16 = arith.subf %0, %15 : vector<16x128xf32>
    %cst_6 = arith.constant -0.199999988 : f32
    %17 = vector.broadcast %cst_6 : f32 to vector<16x128xf32>
    %18 = arith.subf %0, %17 : vector<16x128xf32>
    %cst_7 = arith.constant 0.200000048 : f32
    %19 = vector.broadcast %cst_7 : f32 to vector<16x128xf32>
    %20 = arith.subf %0, %19 : vector<16x128xf32>
    %cst_8 = arith.constant 6.000000e-01 : f32
    %21 = vector.broadcast %cst_8 : f32 to vector<16x128xf32>
    %22 = arith.subf %0, %21 : vector<16x128xf32>
    %cst_9 = arith.constant 1.000000e+00 : f32
    %23 = vector.broadcast %cst_9 : f32 to vector<16x128xf32>
    %24 = arith.subf %0, %23 : vector<16x128xf32>
    %cst_10 = arith.constant 1.4000001 : f32
    %25 = vector.broadcast %cst_10 : f32 to vector<16x128xf32>
    %26 = arith.subf %0, %25 : vector<16x128xf32>
    %cst_11 = arith.constant 1.800000e+00 : f32
    %27 = vector.broadcast %cst_11 : f32 to vector<16x128xf32>
    %28 = arith.subf %0, %27 : vector<16x128xf32>
    %cst_12 = arith.constant 2.200000e+00 : f32
    %29 = vector.broadcast %cst_12 : f32 to vector<16x128xf32>
    %30 = arith.subf %0, %29 : vector<16x128xf32>
    %31 = tpu.concatenate %8, %10, %12, %14, %16, %18, %20, %22, %24, %26, %28, %30 in 0 : vector<16x128xf32>, vector<16x128xf32>, vector<16x128xf32>, vector<16x128xf32>, vector<16x128xf32>, vector<16x128xf32>, vector<16x128xf32>, vector<16x128xf32>, vector<16x128xf32>, vector<16x128xf32>, vector<16x128xf32>, vector<16x128xf32> -> vector<192x128xf32>
    %cst_13 = arith.constant 0.000000e+00 : f32
    %32 = vector.broadcast %cst_13 : f32 to vector<192x128xf32>
    %33 = arith.cmpf oge, %31, %32 : vector<192x128xf32>
    %34 = arith.extui %33 : vector<192x128xi1> to vector<192x128xi32>
    %35 = arith.sitofp %34 : vector<192x128xi32> to vector<192x128xf32>
    %36 = vector.extract_strided_slice %35 {offsets = [0, 0], sizes = [176, 128], strides = [1, 1]} : vector<192x128xf32> to vector<176x128xf32>
    %37 = vector.extract_strided_slice %35 {offsets = [16, 0], sizes = [176, 128], strides = [1, 1]} : vector<192x128xf32> to vector<176x128xf32>
    %38 = arith.subf %36, %37 : vector<176x128xf32>
    %39 = vector.extract_strided_slice %31 {offsets = [0, 0], sizes = [160, 128], strides = [1, 1]} : vector<192x128xf32> to vector<160x128xf32>
    %40 = vector.extract_strided_slice %38 {offsets = [0, 0], sizes = [160, 128], strides = [1, 1]} : vector<176x128xf32> to vector<160x128xf32>
    %41 = arith.mulf %39, %40 : vector<160x128xf32>
    %42 = vector.extract_strided_slice %31 {offsets = [32, 0], sizes = [160, 128], strides = [1, 1]} : vector<192x128xf32> to vector<160x128xf32>
    %43 = vector.extract_strided_slice %38 {offsets = [16, 0], sizes = [160, 128], strides = [1, 1]} : vector<176x128xf32> to vector<160x128xf32>
    %44 = arith.mulf %42, %43 : vector<160x128xf32>
    %45 = arith.subf %41, %44 : vector<160x128xf32>
    %cst_14 = arith.constant 2.500000e+00 : f32
    %46 = vector.broadcast %cst_14 : f32 to vector<160x128xf32>
    %47 = arith.mulf %46, %45 : vector<160x128xf32>
    %48 = vector.extract_strided_slice %31 {offsets = [0, 0], sizes = [144, 128], strides = [1, 1]} : vector<192x128xf32> to vector<144x128xf32>
    %49 = vector.extract_strided_slice %47 {offsets = [0, 0], sizes = [144, 128], strides = [1, 1]} : vector<160x128xf32> to vector<144x128xf32>
    %50 = arith.mulf %48, %49 : vector<144x128xf32>
    %51 = vector.extract_strided_slice %31 {offsets = [48, 0], sizes = [144, 128], strides = [1, 1]} : vector<192x128xf32> to vector<144x128xf32>
    %52 = vector.extract_strided_slice %47 {offsets = [16, 0], sizes = [144, 128], strides = [1, 1]} : vector<160x128xf32> to vector<144x128xf32>
    %53 = arith.mulf %51, %52 : vector<144x128xf32>
    %54 = arith.subf %50, %53 : vector<144x128xf32>
    %cst_15 = arith.constant 1.250000e+00 : f32
    %55 = vector.broadcast %cst_15 : f32 to vector<144x128xf32>
    %56 = arith.mulf %55, %54 : vector<144x128xf32>
    %57 = vector.extract_strided_slice %31 {offsets = [0, 0], sizes = [128, 128], strides = [1, 1]} : vector<192x128xf32> to vector<128x128xf32>
    %58 = vector.extract_strided_slice %56 {offsets = [0, 0], sizes = [128, 128], strides = [1, 1]} : vector<144x128xf32> to vector<128x128xf32>
    %59 = arith.mulf %57, %58 : vector<128x128xf32>
    %60 = vector.extract_strided_slice %31 {offsets = [64, 0], sizes = [128, 128], strides = [1, 1]} : vector<192x128xf32> to vector<128x128xf32>
    %61 = vector.extract_strided_slice %56 {offsets = [16, 0], sizes = [128, 128], strides = [1, 1]} : vector<144x128xf32> to vector<128x128xf32>
    %62 = arith.mulf %60, %61 : vector<128x128xf32>
    %63 = arith.subf %59, %62 : vector<128x128xf32>
    %cst_16 = arith.constant 0.833333313 : f32
    %64 = vector.broadcast %cst_16 : f32 to vector<128x128xf32>
    %65 = arith.mulf %64, %63 : vector<128x128xf32>
    %66 = arith.truncf %6 : vector<16x128xf32> to vector<16x128xbf16>
    %67 = arith.truncf %65 : vector<128x128xf32> to vector<128x128xbf16>
    %68 = tpu.concatenate %66, %67 in 0 : vector<16x128xbf16>, vector<128x128xbf16> -> vector<144x128xbf16>
    %c0_17 = arith.constant 0 : index
    %c0_18 = arith.constant 0 : index
    %69 = vector.load %arg2[%c0_17, %c0_18] : memref<128x144xbf16, #tpu.memory_space<vmem>>, vector<128x144xbf16>
    %cst_19 = arith.constant dense<0.000000e+00> : vector<128x128xf32>
    %70 = tpu.matmul %69, %68, %cst_19 {dimension_numbers = #tpu.dot_dimension_numbers<[1], [0], [0], [1], [0, 0, 1, 1], [], []>} : vector<128x144xbf16>, vector<144x128xbf16>, vector<128x128xf32> -> vector<128x128xf32>
    %c0_20 = arith.constant 0 : index
    %c0_21 = arith.constant 0 : index
    %71 = vector.load %arg3[%c0_20, %c0_21] : memref<128x128xf32, #tpu.memory_space<vmem>>, vector<128x128xf32>
    tpu.vector_store %arg3[%c0_20, %c0_21], %70 {strides = array<i32>} : memref<128x128xf32, #tpu.memory_space<vmem>>, vector<128x128xf32>,
    return
  }
  func.func @transform_0(%arg0: i32) -> (i32, i32) {
    %c0_i32 = arith.constant 0 : i32
    %c0_i32_0 = arith.constant 0 : i32
    return %c0_i32, %arg0 : i32, i32
  }
  func.func @transform_1(%arg0: i32) -> (i32, i32) {
    %c0_i32 = arith.constant 0 : i32
    %c0_i32_0 = arith.constant 0 : i32
    %c0_i32_1 = arith.constant 0 : i32
    return %c0_i32, %c0_i32_0 : i32, i32
  }
  func.func @transform_2(%arg0: i32) -> (i32, i32) {
    %c0_i32 = arith.constant 0 : i32
    %c0_i32_0 = arith.constant 0 : i32
    return %c0_i32, %arg0 : i32, i32
  }
}

</mosaic_0001>

<llo_original>
// kernel: tpu_custom_call.1
$region0: #{tpu_custom_call.1}
  #allocation0 [shape = 'u32[]', space=smem, size = 0x4, offset = 0x4, fixed_abs, tag = 'smem constant byte address 0x4 - core index']
  #allocation1 [shape = 'u32[72,128]{1,0:T(1,128)}', space=vmem, size = 0x9000, scoped, tag = 'internal scratch']
  %s0 = inlined_call_operand.vmem [shape: f32[16,256], index: 0, kind: input, shape index: {}]
  %s1 = inlined_call_operand.vmem [shape: bf16[128,144], index: 1, kind: input, shape index: {}]
  %s2 = inlined_call_operand.hbm [shape: f32[128,256], index: 2, kind: output, shape index: {}]
  %s3 = sld [smem:[#allocation0]]
  $region79: #{tpu_custom_call.1} parent=0
    _
  %s5 = ssub.s32 1, %s3
  %s6 = scalar_select 0, %s5, %s3
  $region1: #{tpu_custom_call.1} parent=0
    #allocation2 [shape = 'u8[16384]{0}', space=vmem, size = 0x4000, scoped, tag = 'input window, operand 0']
    #allocation3 [shape = 'u8[131072]{0}', space=vmem, size = 0x20000, scoped, tag = 'output window, operand 0']
    #allocation4 [shape = 's32[2]{0}', space=sflag, size = 0x8, scoped, tag = 'scoped memory for tpu_custom_call.1']
    %7 = vsyncpa [#allocation4], 0
    %s8 = scalar_lea.sflag [#allocation4], 1
    %9 = vsyncpa %s8, 0
    loop: start=0, step=1, limit=4
    $region2: #{tpu_custom_call.1} parent=1 // loop_pre_header
      _
    $region3: #{tpu_custom_call.1} parent=1 // loop_header
      %s11 = sphi 0, %s15
      %p12 = scmp.ge.s32.totalorder %s11, 4
      %s21 = sphi 0, %s23
      %s24 = sphi 0, %s21
      %s25 = sphi 0, %s24
      %s41 = sphi 0, %s25
      %s45 = sphi 0, %s45
      %s47 = sphi 0, %s45
      %s48 = sphi 0, %s47
      %s62 = sphi 0, %s48
      %s68 = sphi 0, %s70
      %s71 = sphi 0, %s68
      %s72 = sphi 0, %s71
      %s88 = sphi 0, %s72
    $region4: #{tpu_custom_call.1} parent=1 // loop_header_branch
      %14 = sbr.rel (%p12) target = $region8
    $region5: #{tpu_custom_call.1} parent=1 // loop_body
      %s16 = ssub.s32 %s11, 1
      %s17 = ssub.s32 %s11, 2
      %s18 = sadd.s32 %s11, 1
      %s19 = ssub.s32 %s11, %s18
      %p20 = scmp.eq.s32.totalorder %s19, 0
      %s22 = sadd.s32 %s21, 1
      %s23 = scalar_select %p20, %s21, %s22
      %p26 = pneg %p20
      %p27 = scmp.eq.s32.totalorder %s11, 1
      %p28 = por %p26, %p27
      %p29 = scmp.ne.s32.totalorder %s21, %s24
      %p30 = scmp.eq.s32.totalorder %s11, 0
      %p31 = por %p29, %p30
      %p32 = scmp.ne.s32.totalorder %s21, %s24
      %p33 = scmp.eq.s32.totalorder %s16, 1
      %p34 = por %p32, %p33
      %p35 = scmp.ne.s32.totalorder %s24, %s25
      %p36 = scmp.eq.s32.totalorder %s16, 0
      %p37 = por %p35, %p36
      %p38 = scmp.ne.s32.totalorder %s24, %s25
      %p39 = scmp.eq.s32.totalorder %s17, 1
      %p40 = por %p38, %p39
      %p42 = scmp.ne.s32.totalorder %s25, %s41
      %p43 = scmp.eq.s32.totalorder %s17, 0
      %p44 = por %p42, %p43
      %s46 = sadd.s32 %s45, 1
      %p49 = scmp.eq.s32.totalorder %s11, 1
      %p50 = scmp.ne.s32.totalorder %s45, %s47
      %p51 = scmp.eq.s32.totalorder %s11, 0
      %p52 = por %p50, %p51
      %p53 = scmp.ne.s32.totalorder %s45, %s47
      %p54 = scmp.eq.s32.totalorder %s16, 1
      %p55 = por %p53, %p54
      %p56 = scmp.ne.s32.totalorder %s47, %s48
      %p57 = scmp.eq.s32.totalorder %s16, 0
      %p58 = por %p56, %p57
      %p59 = scmp.ne.s32.totalorder %s47, %s48
      %p60 = scmp.eq.s32.totalorder %s17, 1
      %p61 = por %p59, %p60
      %p63 = scmp.ne.s32.totalorder %s48, %s62
      %p64 = scmp.eq.s32.totalorder %s17, 0
      %p65 = por %p63, %p64
      %s66 = ssub.s32 %s11, %s18
      %p67 = scmp.eq.s32.totalorder %s66, 0
      %s69 = sadd.s32 %s68, 1
      %s70 = scalar_select %p67, %s68, %s69
      %p73 = pneg %p67
      %p74 = scmp.eq.s32.totalorder %s11, 1
      %p75 = por %p73, %p74
      %p76 = scmp.ne.s32.totalorder %s68, %s71
      %p77 = scmp.eq.s32.totalorder %s11, 0
      %p78 = por %p76, %p77
      %p79 = scmp.ne.s32.totalorder %s68, %s71
      %p80 = scmp.eq.s32.totalorder %s16, 1
      %p81 = por %p79, %p80
      %p82 = scmp.ne.s32.totalorder %s71, %s72
      %p83 = scmp.eq.s32.totalorder %s16, 0
      %p84 = por %p82, %p83
      %p85 = scmp.ne.s32.totalorder %s71, %s72
      %p86 = scmp.eq.s32.totalorder %s17, 1
      %p87 = por %p85, %p86
      %p89 = scmp.ne.s32.totalorder %s72, %s88
      %p90 = scmp.eq.s32.totalorder %s17, 0
      %p91 = por %p89, %p90
      %p92 = scmp.le.s32.totalorder 1, %s11
      %p93 = scmp.lt.s32.totalorder %s11, 3
      %p94 = pnand %p92, %p93
      %p95 = pneg %p94
      // Predicated region
      $region9: #{tpu_custom_call.1} parent=5 // pred_check
        _
      $region10: #{tpu_custom_call.1} parent=5 // pred_check_branch
        %97 = sbr.rel (%p94) target = $region12
      $region11: #{tpu_custom_call.1} parent=5 // pred_region
        %s98 = ssub.s32 %s11, 1
        // Predicated region
        $region13: #{tpu_custom_call.1} parent=11 // pred_check
          %p99 = pneg %p58
        $region14: #{tpu_custom_call.1} parent=11 // pred_check_branch
          %101 = sbr.rel (%p99) target = $region16
        $region15: #{tpu_custom_call.1} parent=11 // pred_region
          _
        $region16: #{tpu_custom_call.1} parent=11 // pred_fallthru
          _
      $region12: #{tpu_custom_call.1} parent=5 // pred_fallthru
        _
      %p102 = scmp.lt.s32.totalorder %s11, 2
      // Predicated region
      $region17: #{tpu_custom_call.1} parent=5 // pred_check
        %p103 = pneg %p102
      $region18: #{tpu_custom_call.1} parent=5 // pred_check_branch
        %105 = sbr.rel (%p103) target = $region20
      $region19: #{tpu_custom_call.1} parent=5 // pred_region
        // Predicated region
        $region21: #{tpu_custom_call.1} parent=19 // pred_check
          %p106 = pneg %p31
        $region22: #{tpu_custom_call.1} parent=19 // pred_check_branch
          %108 = sbr.rel (%p106) target = $region24
        $region23: #{tpu_custom_call.1} parent=19 // pred_region
          %s109 = sand.u32 %s21, 1
          %s110 = sand.u32 %s21, 1
          %s111 = smul.addr %s110, 16
          %s112 = scalar_lea.vmem [#allocation2], %s111
          %s113 = smul.addr %s11, 8
          %s114 = scalar_lea.vmem %s0, %s113
          // Predicated region
          $region25: #{tpu_custom_call.1} parent=23 // pred_check
            _
          $region26: #{tpu_custom_call.1} parent=23 // pred_check_branch
            %116 = sbr.rel (0) target = $region28
          $region27: #{tpu_custom_call.1} parent=23 // pred_region
            // Predicated region
            $region29: #{tpu_custom_call.1} parent=27 // pred_check
              _
            $region30: #{tpu_custom_call.1} parent=27 // pred_check_branch
              %118 = sbr.rel (0) target = $region32
            $region31: #{tpu_custom_call.1} parent=27 // pred_region
              // Predicated region
              $region44: #{tpu_custom_call.1} parent=31 // pred_check
                _
              $region45: #{tpu_custom_call.1} parent=31 // pred_check_branch
                %136 = sbr.rel (0) target = $region47
              $region46: #{tpu_custom_call.1} parent=31 // pred_region
                loop: start=0, step=1, limit=1
                $region48: #{tpu_custom_call.1} parent=46 // loop_pre_header
                  _
                $region49: #{tpu_custom_call.1} parent=46 // loop_header
                  %s138 = sphi 0, %s142
                  %p139 = scmp.ge.s32.totalorder %s138, 1
                  %s143 = sphi %s114, %s114
                  %s144 = sphi %s112, %s112
                $region50: #{tpu_custom_call.1} parent=46 // loop_header_branch
                  %141 = sbr.rel (%p139) target = $region54
                $region51: #{tpu_custom_call.1} parent=46 // loop_body
                  %v145 = vld [vmem:[%s143] sm:$0xff]
                  %146 = vst [vmem:[%s144] sm:$0xff] %v145
                  %v147 = vld [vmem:[%s143 + $0x10] sm:$0xff]
                  %148 = vst [vmem:[%s144 + $0x8] sm:$0xff] %v147
                $region52: #{tpu_custom_call.1} parent=46 // loop_footer
                  %s142 = sadd.s32 1, %s138
                $region53: #{tpu_custom_call.1} parent=46 // loop_footer_branch
                  %137 = sbr.rel target = $region49
                $region54: #{tpu_custom_call.1} parent=46 // loop_exit
                  _
              $region47: #{tpu_custom_call.1} parent=31 // pred_fallthru
                _
              // Predicated region
              $region55: #{tpu_custom_call.1} parent=31 // pred_check
                _
              $region56: #{tpu_custom_call.1} parent=31 // pred_check_branch
                %150 = sbr.rel target = $region58
              $region57: #{tpu_custom_call.1} parent=31 // pred_region
                _
              $region58: #{tpu_custom_call.1} parent=31 // pred_fallthru
                _
            $region32: #{tpu_custom_call.1} parent=27 // pred_fallthru
              _
            // Predicated region
            $region33: #{tpu_custom_call.1} parent=27 // pred_check
              _
            $region34: #{tpu_custom_call.1} parent=27 // pred_check_branch
              %120 = sbr.rel target = $region36
            $region35: #{tpu_custom_call.1} parent=27 // pred_region
              %s122 = ssub.s32 256, 1
              loop: start=0, step=1, limit=1
              $region37: #{tpu_custom_call.1} parent=35 // loop_pre_header
                _
              $region38: #{tpu_custom_call.1} parent=35 // loop_header
                %s124 = sphi 0, %s128
                %p125 = scmp.ge.s32.totalorder %s124, 1
                %s129 = sphi %s114, %s114
                %s130 = sphi %s112, %s112
              $region39: #{tpu_custom_call.1} parent=35 // loop_header_branch
                %127 = sbr.rel (%p125) target = $region43
              $region40: #{tpu_custom_call.1} parent=35 // loop_body
                %v131 = vld [vmem:[%s129] sm:%s122]
                %132 = vst [vmem:[%s130] sm:%s122] %v131
                %v133 = vld [vmem:[%s129 + $0x10] sm:%s122]
                %134 = vst [vmem:[%s130 + $0x8] sm:%s122] %v133
              $region41: #{tpu_custom_call.1} parent=35 // loop_footer
                %s128 = sadd.s32 1, %s124
              $region42: #{tpu_custom_call.1} parent=35 // loop_footer_branch
                %123 = sbr.rel target = $region38
              $region43: #{tpu_custom_call.1} parent=35 // loop_exit
                _
            $region36: #{tpu_custom_call.1} parent=27 // pred_fallthru
              _
          $region28: #{tpu_custom_call.1} parent=23 // pred_fallthru
            _
          %151 = vnop
        $region24: #{tpu_custom_call.1} parent=19 // pred_fallthru
          _
      $region20: #{tpu_custom_call.1} parent=5 // pred_fallthru
        _
      %p152 = scmp.le.s32.totalorder 1, %s11
      %p153 = scmp.lt.s32.totalorder %s11, 3
      %p154 = pnand %p152, %p153
      %p155 = pneg %p154
      // Predicated region
      $region59: #{tpu_custom_call.1} parent=5 // pred_check
        _
      $region60: #{tpu_custom_call.1} parent=5 // pred_check_branch
        %157 = sbr.rel (%p154) target = $region62
      $region61: #{tpu_custom_call.1} parent=5 // pred_region
        %s158 = ssub.s32 %s11, 1
        %s159 = sand.u32 %s24, 1
        %s160 = sand.u32 %s24, 1
        %s161 = smul.addr %s160, 16
        %s162 = scalar_lea.vmem [#allocation2], %s161
        // Predicated region
        $region63: #{tpu_custom_call.1} parent=61 // pred_check
          %p163 = pneg %p37
        $region64: #{tpu_custom_call.1} parent=61 // pred_check_branch
          %165 = sbr.rel (%p163) target = $region66
        $region65: #{tpu_custom_call.1} parent=61 // pred_region
          _
        $region66: #{tpu_custom_call.1} parent=61 // pred_fallthru
          _
        %s166 = sand.u32 %s24, 1
        %s167 = sand.u32 %s24, 1
        %s168 = smul.addr %s167, 16
        %s169 = scalar_lea.vmem [#allocation2], %s168
        %p170 = pneg %p37
        %p171 = pneg %p34
        %p172 = pneg %p58
        %p173 = pneg %p55
        %p174 = pneg %p84
        %p175 = pneg %p81
        %s176 = sand.u32 %s71, 1
        %s177 = scalar_lea.sflag [#allocation4], %s176
        %s178 = sand.u32 %s71, 1
        %s179 = smul.addr %s178, 128
        %s180 = scalar_lea.vmem [#allocation3], %s179
        %v182 = vld [vmem:[%s162] sm:$0xff]
        %v183 = vld [vmem:[%s162 + $0x8] sm:$0xff]
        %v184 = vxor.u32 %v182, 2147483648
        %v185 = vxor.u32 %v183, 2147483648
        %v186 = vmul.f32 %v184, 1.442695
        %v187 = vpow.pop %v186
        %v188 = vmul.f32 %v185, 1.442695
        %v189 = vpow.pop %v188
        %v190 = vadd.f32 %v187, 1.0
        %v191 = vadd.f32 %v189, 1.0
        %v192 = vrcp.pop %v190
        %v193 = vmul.f32 %v190, %v192
        %v194 = vsub.f32 1.0, %v193
        %v195 = vmul.f32 %v192, %v194
        %v196 = vadd.f32 %v192, %v195
        %vm197 = vweird.f32 %v190
        %vm198 = vweird.f32 %v192
        %vm199 = vmor %vm197, %vm198
        %v200 = vsel %vm199, %v192, %v196
        %v201 = vand.u32 2147483647, %v190
        %vm202 = vcmp.eq.f32.partialorder %v201, 8.507059e+37
        %v203 = vand.u32 %v190, 2147483648
        %v204 = vor.u32 1.1754944e-38, %v203
        %v205 = vsel %vm202, %v204, %v200
        %v206 = vmul.f32 1.0, %v205
        %v207 = vrcp.pop %v191
        %v208 = vmul.f32 %v191, %v207
        %v209 = vsub.f32 1.0, %v208
        %v210 = vmul.f32 %v207, %v209
        %v211 = vadd.f32 %v207, %v210
        %vm212 = vweird.f32 %v191
        %vm213 = vweird.f32 %v207
        %vm214 = vmor %vm212, %vm213
        %v215 = vsel %vm214, %v207, %v211
        %v216 = vand.u32 2147483647, %v191
        %vm217 = vcmp.eq.f32.partialorder %v216, 8.507059e+37
        %v218 = vand.u32 %v191, 2147483648
        %v219 = vor.u32 1.1754944e-38, %v218
        %v220 = vsel %vm217, %v219, %v215
        %v221 = vmul.f32 1.0, %v220
        %v222 = vmul.f32 %v182, %v206
        %v223 = vmul.f32 %v183, %v221
        %v224 = vsub.f32 %v182, -2.2
        %v225 = vsub.f32 %v183, -2.2
        %v226 = vsub.f32 %v182, -1.8
        %v227 = vsub.f32 %v183, -1.8
        %v228 = vsub.f32 %v182, -1.4
        %v229 = vsub.f32 %v183, -1.4
        %v230 = vsub.f32 %v182, -1.0
        %v231 = vsub.f32 %v183, -1.0
        %v232 = vsub.f32 %v182, -0.6
        %v233 = vsub.f32 %v183, -0.6
        %v234 = vsub.f32 %v182, -0.19999999
        %v235 = vsub.f32 %v183, -0.19999999
        %v236 = vsub.f32 %v182, 0.20000005
        %v237 = vsub.f32 %v183, 0.20000005
        %v238 = vsub.f32 %v182, 0.6
        %v239 = vsub.f32 %v183, 0.6
        %v240 = vsub.f32 %v182, 1.0
        %v241 = vsub.f32 %v183, 1.0
        %v242 = vsub.f32 %v182, 1.4000001
        %v243 = vsub.f32 %v183, 1.4000001
        %v244 = vsub.f32 %v182, 1.8
        %v245 = vsub.f32 %v183, 1.8
        %v246 = vsub.f32 %v182, 2.2
        %v247 = vsub.f32 %v183, 2.2
        %vm248 = vcmp.ge.f32.partialorder %v224, 0.0
        %vm249 = vcmp.ge.f32.partialorder %v225, 0.0
        %vm250 = vcmp.ge.f32.partialorder %v226, 0.0
        %vm251 = vcmp.ge.f32.partialorder %v227, 0.0
        %vm252 = vcmp.ge.f32.partialorder %v228, 0.0
        %vm253 = vcmp.ge.f32.partialorder %v229, 0.0
        %vm254 = vcmp.ge.f32.partialorder %v230, 0.0
        %vm255 = vcmp.ge.f32.partialorder %v231, 0.0
        %vm256 = vcmp.ge.f32.partialorder %v232, 0.0
        %vm257 = vcmp.ge.f32.partialorder %v233, 0.0
        %vm258 = vcmp.ge.f32.partialorder %v234, 0.0
        %vm259 = vcmp.ge.f32.partialorder %v235, 0.0
        %vm260 = vcmp.ge.f32.partialorder %v236, 0.0
        %vm261 = vcmp.ge.f32.partialorder %v237, 0.0
        %vm262 = vcmp.ge.f32.partialorder %v238, 0.0
        %vm263 = vcmp.ge.f32.partialorder %v239, 0.0
        %vm264 = vcmp.ge.f32.partialorder %v240, 0.0
        %vm265 = vcmp.ge.f32.partialorder %v241, 0.0
        %vm266 = vcmp.ge.f32.partialorder %v242, 0.0
        %vm267 = vcmp.ge.f32.partialorder %v243, 0.0
        %vm268 = vcmp.ge.f32.partialorder %v244, 0.0
        %vm269 = vcmp.ge.f32.partialorder %v245, 0.0
        %vm270 = vcmp.ge.f32.partialorder %v246, 0.0
        %vm271 = vcmp.ge.f32.partialorder %v247, 0.0
        %v272 = vsel %vm248, 1, 0
        %v273 = vsel %vm249, 1, 0
        %v274 = vsel %vm250, 1, 0
        %v275 = vsel %vm251, 1, 0
        %v276 = vsel %vm252, 1, 0
        %v277 = vsel %vm253, 1, 0
        %v278 = vsel %vm254, 1, 0
        %v279 = vsel %vm255, 1, 0
        %v280 = vsel %vm256, 1, 0
        %v281 = vsel %vm257, 1, 0
        %v282 = vsel %vm258, 1, 0
        %v283 = vsel %vm259, 1, 0
        %v284 = vsel %vm260, 1, 0
        %v285 = vsel %vm261, 1, 0
        %v286 = vsel %vm262, 1, 0
        %v287 = vsel %vm263, 1, 0
        %v288 = vsel %vm264, 1, 0
        %v289 = vsel %vm265, 1, 0
        %v290 = vsel %vm266, 1, 0
        %v291 = vsel %vm267, 1, 0
        %v292 = vsel %vm268, 1, 0
        %v293 = vsel %vm269, 1, 0
        %v294 = vsel %vm270, 1, 0
        %v295 = vsel %vm271, 1, 0
        %v296 = vcvt.s32.f32 %v272
        %v297 = vcvt.s32.f32 %v273
        %v298 = vcvt.s32.f32 %v274
        %v299 = vcvt.s32.f32 %v275
        %v300 = vcvt.s32.f32 %v276
        %v301 = vcvt.s32.f32 %v277
        %v302 = vcvt.s32.f32 %v278
        %v303 = vcvt.s32.f32 %v279
        %v304 = vcvt.s32.f32 %v280
        %v305 = vcvt.s32.f32 %v281
        %v306 = vcvt.s32.f32 %v282
        %v307 = vcvt.s32.f32 %v283
        %v308 = vcvt.s32.f32 %v284
        %v309 = vcvt.s32.f32 %v285
        %v310 = vcvt.s32.f32 %v286
        %v311 = vcvt.s32.f32 %v287
        %v312 = vcvt.s32.f32 %v288
        %v313 = vcvt.s32.f32 %v289
        %v314 = vcvt.s32.f32 %v290
        %v315 = vcvt.s32.f32 %v291
        %v316 = vcvt.s32.f32 %v292
        %v317 = vcvt.s32.f32 %v293
        %v318 = vcvt.s32.f32 %v294
        %v319 = vcvt.s32.f32 %v295
        %v320 = vsub.f32 %v296, %v298
        %v321 = vsub.f32 %v297, %v299
        %v322 = vsub.f32 %v298, %v300
        %v323 = vsub.f32 %v299, %v301
        %v324 = vsub.f32 %v300, %v302
        %v325 = vsub.f32 %v301, %v303
        %v326 = vsub.f32 %v302, %v304
        %v327 = vsub.f32 %v303, %v305
        %v328 = vsub.f32 %v304, %v306
        %v329 = vsub.f32 %v305, %v307
        %v330 = vsub.f32 %v306, %v308
        %v331 = vsub.f32 %v307, %v309
        %v332 = vsub.f32 %v308, %v310
        %v333 = vsub.f32 %v309, %v311
        %v334 = vsub.f32 %v310, %v312
        %v335 = vsub.f32 %v311, %v313
        %v336 = vsub.f32 %v312, %v314
        %v337 = vsub.f32 %v313, %v315
        %v338 = vsub.f32 %v314, %v316
        %v339 = vsub.f32 %v315, %v317
        %v340 = vsub.f32 %v316, %v318
        %v341 = vsub.f32 %v317, %v319
        %v342 = vmul.f32 %v224, %v320
        %v343 = vmul.f32 %v225, %v321
        %v344 = vmul.f32 %v226, %v322
        %v345 = vmul.f32 %v227, %v323
        %v346 = vmul.f32 %v228, %v324
        %v347 = vmul.f32 %v229, %v325
        %v348 = vmul.f32 %v230, %v326
        %v349 = vmul.f32 %v231, %v327
        %v350 = vmul.f32 %v232, %v328
        %v351 = vmul.f32 %v233, %v329
        %v352 = vmul.f32 %v234, %v330
        %v353 = vmul.f32 %v235, %v331
        %v354 = vmul.f32 %v236, %v332
        %v355 = vmul.f32 %v237, %v333
        %v356 = vmul.f32 %v238, %v334
        %v357 = vmul.f32 %v239, %v335
        %v358 = vmul.f32 %v240, %v336
        %v359 = vmul.f32 %v241, %v337
        %v360 = vmul.f32 %v242, %v338
        %v361 = vmul.f32 %v243, %v339
        %v362 = vmul.f32 %v228, %v322
        %v363 = vmul.f32 %v229, %v323
        %v364 = vmul.f32 %v230, %v324
        %v365 = vmul.f32 %v231, %v325
        %v366 = vmul.f32 %v232, %v326
        %v367 = vmul.f32 %v233, %v327
        %v368 = vmul.f32 %v234, %v328
        %v369 = vmul.f32 %v235, %v329
        %v370 = vmul.f32 %v236, %v330
        %v371 = vmul.f32 %v237, %v331
        %v372 = vmul.f32 %v238, %v332
        %v373 = vmul.f32 %v239, %v333
        %v374 = vmul.f32 %v240, %v334
        %v375 = vmul.f32 %v241, %v335
        %v376 = vmul.f32 %v242, %v336
        %v377 = vmul.f32 %v243, %v337
        %v378 = vmul.f32 %v244, %v338
        %v379 = vmul.f32 %v245, %v339
        %v380 = vmul.f32 %v246, %v340
        %v381 = vmul.f32 %v247, %v341
        %v382 = vsub.f32 %v342, %v362
        %v383 = vsub.f32 %v343, %v363
        %v384 = vsub.f32 %v344, %v364
        %v385 = vsub.f32 %v345, %v365
        %v386 = vsub.f32 %v346, %v366
        %v387 = vsub.f32 %v347, %v367
        %v388 = vsub.f32 %v348, %v368
        %v389 = vsub.f32 %v349, %v369
        %v390 = vsub.f32 %v350, %v370
        %v391 = vsub.f32 %v351, %v371
        %v392 = vsub.f32 %v352, %v372
        %v393 = vsub.f32 %v353, %v373
        %v394 = vsub.f32 %v354, %v374
        %v395 = vsub.f32 %v355, %v375
        %v396 = vsub.f32 %v356, %v376
        %v397 = vsub.f32 %v357, %v377
        %v398 = vsub.f32 %v358, %v378
        %v399 = vsub.f32 %v359, %v379
        %v400 = vsub.f32 %v360, %v380
        %v401 = vsub.f32 %v361, %v381
        %v402 = vmul.f32 %v382, 2.5
        %v403 = vmul.f32 %v383, 2.5
        %v404 = vmul.f32 %v384, 2.5
        %v405 = vmul.f32 %v385, 2.5
        %v406 = vmul.f32 %v386, 2.5
        %v407 = vmul.f32 %v387, 2.5
        %v408 = vmul.f32 %v388, 2.5
        %v409 = vmul.f32 %v389, 2.5
        %v410 = vmul.f32 %v390, 2.5
        %v411 = vmul.f32 %v391, 2.5
        %v412 = vmul.f32 %v392, 2.5
        %v413 = vmul.f32 %v393, 2.5
        %v414 = vmul.f32 %v394, 2.5
        %v415 = vmul.f32 %v395, 2.5
        %v416 = vmul.f32 %v396, 2.5
        %v417 = vmul.f32 %v397, 2.5
        %v418 = vmul.f32 %v398, 2.5
        %v419 = vmul.f32 %v399, 2.5
        %v420 = vmul.f32 %v400, 2.5
        %v421 = vmul.f32 %v401, 2.5
        %v422 = vmul.f32 %v224, %v402
        %v423 = vmul.f32 %v225, %v403
        %v424 = vmul.f32 %v226, %v404
        %v425 = vmul.f32 %v227, %v405
        %v426 = vmul.f32 %v228, %v406
        %v427 = vmul.f32 %v229, %v407
        %v428 = vmul.f32 %v230, %v408
        %v429 = vmul.f32 %v231, %v409
        %v430 = vmul.f32 %v232, %v410
        %v431 = vmul.f32 %v233, %v411
        %v432 = vmul.f32 %v234, %v412
        %v433 = vmul.f32 %v235, %v413
        %v434 = vmul.f32 %v236, %v414
        %v435 = vmul.f32 %v237, %v415
        %v436 = vmul.f32 %v238, %v416
        %v437 = vmul.f32 %v239, %v417
        %v438 = vmul.f32 %v240, %v418
        %v439 = vmul.f32 %v241, %v419
        %v440 = vmul.f32 %v230, %v404
        %v441 = vmul.f32 %v231, %v405
        %v442 = vmul.f32 %v232, %v406
        %v443 = vmul.f32 %v233, %v407
        %v444 = vmul.f32 %v234, %v408
        %v445 = vmul.f32 %v235, %v409
        %v446 = vmul.f32 %v236, %v410
        %v447 = vmul.f32 %v237, %v411
        %v448 = vmul.f32 %v238, %v412
        %v449 = vmul.f32 %v239, %v413
        %v450 = vmul.f32 %v240, %v414
        %v451 = vmul.f32 %v241, %v415
        %v452 = vmul.f32 %v242, %v416
        %v453 = vmul.f32 %v243, %v417
        %v454 = vmul.f32 %v244, %v418
        %v455 = vmul.f32 %v245, %v419
        %v456 = vmul.f32 %v246, %v420
        %v457 = vmul.f32 %v247, %v421
        %v458 = vsub.f32 %v422, %v440
        %v459 = vsub.f32 %v423, %v441
        %v460 = vsub.f32 %v424, %v442
        %v461 = vsub.f32 %v425, %v443
        %v462 = vsub.f32 %v426, %v444
        %v463 = vsub.f32 %v427, %v445
        %v464 = vsub.f32 %v428, %v446
        %v465 = vsub.f32 %v429, %v447
        %v466 = vsub.f32 %v430, %v448
        %v467 = vsub.f32 %v431, %v449
        %v468 = vsub.f32 %v432, %v450
        %v469 = vsub.f32 %v433, %v451
        %v470 = vsub.f32 %v434, %v452
        %v471 = vsub.f32 %v435, %v453
        %v472 = vsub.f32 %v436, %v454
        %v473 = vsub.f32 %v437, %v455
        %v474 = vsub.f32 %v438, %v456
        %v475 = vsub.f32 %v439, %v457
        %v476 = vmul.f32 %v458, 1.25
        %v477 = vmul.f32 %v459, 1.25
        %v478 = vmul.f32 %v460, 1.25
        %v479 = vmul.f32 %v461, 1.25
        %v480 = vmul.f32 %v462, 1.25
        %v481 = vmul.f32 %v463, 1.25
        %v482 = vmul.f32 %v464, 1.25
        %v483 = vmul.f32 %v465, 1.25
        %v484 = vmul.f32 %v466, 1.25
        %v485 = vmul.f32 %v467, 1.25
        %v486 = vmul.f32 %v468, 1.25
        %v487 = vmul.f32 %v469, 1.25
        %v488 = vmul.f32 %v470, 1.25
        %v489 = vmul.f32 %v471, 1.25
        %v490 = vmul.f32 %v472, 1.25
        %v491 = vmul.f32 %v473, 1.25
        %v492 = vmul.f32 %v474, 1.25
        %v493 = vmul.f32 %v475, 1.25
        %v494 = vmul.f32 %v224, %v476
        %v495 = vmul.f32 %v225, %v477
        %v496 = vmul.f32 %v226, %v478
        %v497 = vmul.f32 %v227, %v479
        %v498 = vmul.f32 %v228, %v480
        %v499 = vmul.f32 %v229, %v481
        %v500 = vmul.f32 %v230, %v482
        %v501 = vmul.f32 %v231, %v483
        %v502 = vmul.f32 %v232, %v484
        %v503 = vmul.f32 %v233, %v485
        %v504 = vmul.f32 %v234, %v486
        %v505 = vmul.f32 %v235, %v487
        %v506 = vmul.f32 %v236, %v488
        %v507 = vmul.f32 %v237, %v489
        %v508 = vmul.f32 %v238, %v490
        %v509 = vmul.f32 %v239, %v491
        %v510 = vmul.f32 %v232, %v478
        %v511 = vmul.f32 %v233, %v479
        %v512 = vmul.f32 %v234, %v480
        %v513 = vmul.f32 %v235, %v481
        %v514 = vmul.f32 %v236, %v482
        %v515 = vmul.f32 %v237, %v483
        %v516 = vmul.f32 %v238, %v484
        %v517 = vmul.f32 %v239, %v485
        %v518 = vmul.f32 %v240, %v486
        %v519 = vmul.f32 %v241, %v487
        %v520 = vmul.f32 %v242, %v488
        %v521 = vmul.f32 %v243, %v489
        %v522 = vmul.f32 %v244, %v490
        %v523 = vmul.f32 %v245, %v491
        %v524 = vmul.f32 %v246, %v492
        %v525 = vmul.f32 %v247, %v493
        %v526 = vsub.f32 %v494, %v510
        %v527 = vsub.f32 %v495, %v511
        %v528 = vsub.f32 %v496, %v512
        %v529 = vsub.f32 %v497, %v513
        %v530 = vsub.f32 %v498, %v514
        %v531 = vsub.f32 %v499, %v515
        %v532 = vsub.f32 %v500, %v516
        %v533 = vsub.f32 %v501, %v517
        %v534 = vsub.f32 %v502, %v518
        %v535 = vsub.f32 %v503, %v519
        %v536 = vsub.f32 %v504, %v520
        %v537 = vsub.f32 %v505, %v521
        %v538 = vsub.f32 %v506, %v522
        %v539 = vsub.f32 %v507, %v523
        %v540 = vsub.f32 %v508, %v524
        %v541 = vsub.f32 %v509, %v525
        %v542 = vmul.f32 %v526, 0.8333333
        %v543 = vmul.f32 %v527, 0.8333333
        %v544 = vmul.f32 %v528, 0.8333333
        %v545 = vmul.f32 %v529, 0.8333333
        %v546 = vmul.f32 %v530, 0.8333333
        %v547 = vmul.f32 %v531, 0.8333333
        %v548 = vmul.f32 %v532, 0.8333333
        %v549 = vmul.f32 %v533, 0.8333333
        %v550 = vmul.f32 %v534, 0.8333333
        %v551 = vmul.f32 %v535, 0.8333333
        %v552 = vmul.f32 %v536, 0.8333333
        %v553 = vmul.f32 %v537, 0.8333333
        %v554 = vmul.f32 %v538, 0.8333333
        %v555 = vmul.f32 %v539, 0.8333333
        %v556 = vmul.f32 %v540, 0.8333333
        %v557 = vmul.f32 %v541, 0.8333333
        %v558 = vpack.c.bf16 %v222, %v222
        %v559 = vpack.c.bf16 %v223, %v223
        %v560 = vpack.c.bf16 %v542, %v542
        %v561 = vpack.c.bf16 %v543, %v543
        %v562 = vpack.c.bf16 %v544, %v544
        %v563 = vpack.c.bf16 %v545, %v545
        %v564 = vpack.c.bf16 %v546, %v546
        %v565 = vpack.c.bf16 %v547, %v547
        %v566 = vpack.c.bf16 %v548, %v548
        %v567 = vpack.c.bf16 %v549, %v549
        %v568 = vpack.c.bf16 %v550, %v550
        %v569 = vpack.c.bf16 %v551, %v551
        %v570 = vpack.c.bf16 %v552, %v552
        %v571 = vpack.c.bf16 %v553, %v553
        %v572 = vpack.c.bf16 %v554, %v554
        %v573 = vpack.c.bf16 %v555, %v555
        %v574 = vpack.c.bf16 %v556, %v556
        %v575 = vpack.c.bf16 %v557, %v557
        %v578 = vunpack.c.l.b16 %v558
        %v579 = vunpack.c.l.b16 %v559
        %v580 = vpack.c.b16 %v579, %v578
        %v598 = vunpack.c.l.b16 %v560
        %v599 = vunpack.c.l.b16 %v561
        %v600 = vunpack.c.l.b16 %v562
        %v601 = vunpack.c.l.b16 %v563
        %v602 = vunpack.c.l.b16 %v564
        %v603 = vunpack.c.l.b16 %v565
        %v604 = vunpack.c.l.b16 %v566
        %v605 = vunpack.c.l.b16 %v567
        %v606 = vunpack.c.l.b16 %v568
        %v607 = vunpack.c.l.b16 %v569
        %v608 = vunpack.c.l.b16 %v570
        %v609 = vunpack.c.l.b16 %v571
        %v610 = vunpack.c.l.b16 %v572
        %v611 = vunpack.c.l.b16 %v573
        %v612 = vunpack.c.l.b16 %v574
        %v613 = vunpack.c.l.b16 %v575
        %v614 = vpack.c.b16 %v599, %v598
        %v615 = vpack.c.b16 %v601, %v600
        %v616 = vpack.c.b16 %v603, %v602
        %v617 = vpack.c.b16 %v605, %v604
        %v618 = vpack.c.b16 %v607, %v606
        %v619 = vpack.c.b16 %v609, %v608
        %v620 = vpack.c.b16 %v611, %v610
        %v621 = vpack.c.b16 %v613, %v612
        %v630 = vld [vmem:[%s1] sm:$0xff]
        %v631 = vld [vmem:[%s1 + $0x8] sm:$0xff]
        %v632 = vld [vmem:[%s1 + $0x10] sm:$0xff]
        %v633 = vld [vmem:[%s1 + $0x18] sm:$0xff]
        %v634 = vld [vmem:[%s1 + $0x20] sm:$0xff]
        %v635 = vld [vmem:[%s1 + $0x28] sm:$0xff]
        %v636 = vld [vmem:[%s1 + $0x30] sm:$0xff]
        %v637 = vld [vmem:[%s1 + $0x38] sm:$0xff]
        %v638 = vld [vmem:[%s1 + $0x40] sm:$0xff]
        %v639 = vld [vmem:[%s1 + $0x48] sm:$0xff]
        %v640 = vld [vmem:[%s1 + $0x50] sm:$0xff]
        %v641 = vld [vmem:[%s1 + $0x58] sm:$0xff]
        %v642 = vld [vmem:[%s1 + $0x60] sm:$0xff]
        %v643 = vld [vmem:[%s1 + $0x68] sm:$0xff]
        %v644 = vld [vmem:[%s1 + $0x70] sm:$0xff]
        %v645 = vld [vmem:[%s1 + $0x78] sm:$0xff]
        %v662 = vunpack.c.l.b16 %v630
        %v663 = vunpack.c.h.b16 %v630
        %v664 = vunpack.c.l.b16 %v631
        %v665 = vunpack.c.h.b16 %v631
        %v666 = vunpack.c.l.b16 %v632
        %v667 = vunpack.c.h.b16 %v632
        %v668 = vunpack.c.l.b16 %v633
        %v669 = vunpack.c.h.b16 %v633
        %v670 = vunpack.c.l.b16 %v634
        %v671 = vunpack.c.h.b16 %v634
        %v672 = vunpack.c.l.b16 %v635
        %v673 = vunpack.c.h.b16 %v635
        %v674 = vunpack.c.l.b16 %v636
        %v675 = vunpack.c.h.b16 %v636
        %v676 = vunpack.c.l.b16 %v637
        %v677 = vunpack.c.h.b16 %v637
        %v678 = vunpack.c.l.b16 %v638
        %v679 = vunpack.c.h.b16 %v638
        %v680 = vunpack.c.l.b16 %v639
        %v681 = vunpack.c.h.b16 %v639
        %v682 = vunpack.c.l.b16 %v640
        %v683 = vunpack.c.h.b16 %v640
        %v684 = vunpack.c.l.b16 %v641
        %v685 = vunpack.c.h.b16 %v641
        %v686 = vunpack.c.l.b16 %v642
        %v687 = vunpack.c.h.b16 %v642
        %v688 = vunpack.c.l.b16 %v643
        %v689 = vunpack.c.h.b16 %v643
        %v690 = vunpack.c.l.b16 %v644
        %v691 = vunpack.c.h.b16 %v644
        %v692 = vunpack.c.l.b16 %v645
        %v693 = vunpack.c.h.b16 %v645
        %v694 = vpack.c.b16 %v664, %v662
        %v695 = vpack.c.b16 %v665, %v663
        %v696 = vpack.c.b16 %v668, %v666
        %v697 = vpack.c.b16 %v669, %v667
        %v698 = vpack.c.b16 %v672, %v670
        %v699 = vpack.c.b16 %v673, %v671
        %v700 = vpack.c.b16 %v676, %v674
        %v701 = vpack.c.b16 %v677, %v675
        %v702 = vpack.c.b16 %v680, %v678
        %v703 = vpack.c.b16 %v681, %v679
        %v704 = vpack.c.b16 %v684, %v682
        %v705 = vpack.c.b16 %v685, %v683
        %v706 = vpack.c.b16 %v688, %v686
        %v707 = vpack.c.b16 %v689, %v687
        %v708 = vpack.c.b16 %v692, %v690
        %v709 = vpack.c.b16 %v693, %v691
        %vm718 = vcmask 130048
        %v720 = vsel %vm718, %v695, 0
        %v723 = vsel %vm718, %v697, 0
        %v726 = vsel %vm718, %v699, 0
        %v729 = vsel %vm718, %v701, 0
        %v732 = vsel %vm718, %v703, 0
        %v735 = vsel %vm718, %v705, 0
        %v738 = vsel %vm718, %v707, 0
        %v741 = vsel %vm718, %v709, 0
        %743 = vmatpush.bf16.msra.mxu0 %v620
        %744 = vmatpush.bf16.msra.mxu0 %v619
        %745 = vmatpush.bf16.msra.mxu0 %v618
        %746 = vmatpush.bf16.msra.mxu0 %v617
        %747 = vmatpush.bf16.msra.mxu0 %v616
        %748 = vmatpush.bf16.msra.mxu0 %v615
        %749 = vmatpush.bf16.msra.mxu0 %v614
        %750 = vmatpush.bf16.msra.mxu0 %v580
        %751 = vmatmul.bf16.gmra.mxu0 %v694
        %v752 = vpop.f32.mrf.mxu0
        %v753 = vadd.f32 0.0, %v752
        %v754 = vpop.f32.mrf.mxu0
        %v755 = vadd.f32 0.0, %v754
        %756 = vmatmul.bf16.gmra.mxu0 %v696
        %v757 = vpop.f32.mrf.mxu0
        %v758 = vadd.f32 0.0, %v757
        %v759 = vpop.f32.mrf.mxu0
        %v760 = vadd.f32 0.0, %v759
        %761 = vmatmul.bf16.gmra.mxu0 %v698
        %v762 = vpop.f32.mrf.mxu0
        %v763 = vadd.f32 0.0, %v762
        %v764 = vpop.f32.mrf.mxu0
        %v765 = vadd.f32 0.0, %v764
        %766 = vmatmul.bf16.gmra.mxu0 %v700
        %v767 = vpop.f32.mrf.mxu0
        %v768 = vadd.f32 0.0, %v767
        %v769 = vpop.f32.mrf.mxu0
        %v770 = vadd.f32 0.0, %v769
        %771 = vmatmul.bf16.gmra.mxu0 %v702
        %v772 = vpop.f32.mrf.mxu0
        %v773 = vadd.f32 0.0, %v772
        %v774 = vpop.f32.mrf.mxu0
        %v775 = vadd.f32 0.0, %v774
        %776 = vmatmul.bf16.gmra.mxu0 %v704
        %v777 = vpop.f32.mrf.mxu0
        %v778 = vadd.f32 0.0, %v777
        %v779 = vpop.f32.mrf.mxu0
        %v780 = vadd.f32 0.0, %v779
        %781 = vmatmul.bf16.gmra.mxu0 %v706
        %v782 = vpop.f32.mrf.mxu0
        %v783 = vadd.f32 0.0, %v782
        %v784 = vpop.f32.mrf.mxu0
        %v785 = vadd.f32 0.0, %v784
        %786 = vmatmul.bf16.gmra.mxu0 %v708
        %v787 = vpop.f32.mrf.mxu0
        %v788 = vadd.f32 0.0, %v787
        %v789 = vpop.f32.mrf.mxu0
        %v790 = vadd.f32 0.0, %v789
        %791 = vdwg.mxu0
        %792 = vmatpush.bf16.msra.mxu0 0
        %793 = vmatpush.bf16.msra.mxu0 0
        %794 = vmatpush.bf16.msra.mxu0 0
        %795 = vmatpush.bf16.msra.mxu0 0
        %796 = vmatpush.bf16.msra.mxu0 0
        %797 = vmatpush.bf16.msra.mxu0 0
        %798 = vmatpush.bf16.msra.mxu0 0
        %799 = vmatpush.bf16.msra.mxu0 %v621
        %800 = vmatmul.bf16.gmra.mxu0 %v720
        %v801 = vpop.f32.mrf.mxu0
        %v802 = vadd.f32 %v753, %v801
        %v803 = vpop.f32.mrf.mxu0
        %v804 = vadd.f32 %v755, %v803
        %805 = vmatmul.bf16.gmra.mxu0 %v723
        %v806 = vpop.f32.mrf.mxu0
        %v807 = vadd.f32 %v758, %v806
        %v808 = vpop.f32.mrf.mxu0
        %v809 = vadd.f32 %v760, %v808
        %810 = vmatmul.bf16.gmra.mxu0 %v726
        %v811 = vpop.f32.mrf.mxu0
        %v812 = vadd.f32 %v763, %v811
        %v813 = vpop.f32.mrf.mxu0
        %v814 = vadd.f32 %v765, %v813
        %815 = vmatmul.bf16.gmra.mxu0 %v729
        %v816 = vpop.f32.mrf.mxu0
        %v817 = vadd.f32 %v768, %v816
        %v818 = vpop.f32.mrf.mxu0
        %v819 = vadd.f32 %v770, %v818
        %820 = vmatmul.bf16.gmra.mxu0 %v732
        %v821 = vpop.f32.mrf.mxu0
        %v822 = vadd.f32 %v773, %v821
        %v823 = vpop.f32.mrf.mxu0
        %v824 = vadd.f32 %v775, %v823
        %825 = vmatmul.bf16.gmra.mxu0 %v735
        %v826 = vpop.f32.mrf.mxu0
        %v827 = vadd.f32 %v778, %v826
        %v828 = vpop.f32.mrf.mxu0
        %v829 = vadd.f32 %v780, %v828
        %830 = vmatmul.bf16.gmra.mxu0 %v738
        %v831 = vpop.f32.mrf.mxu0
        %v832 = vadd.f32 %v783, %v831
        %v833 = vpop.f32.mrf.mxu0
        %v834 = vadd.f32 %v785, %v833
        %835 = vmatmul.bf16.gmra.mxu0 %v741
        %v836 = vpop.f32.mrf.mxu0
        %v837 = vadd.f32 %v788, %v836
        %v838 = vpop.f32.mrf.mxu0
        %v839 = vadd.f32 %v790, %v838
        %840 = vdwg.mxu0
        %841 = vst [vmem:[%s180] sm:$0xff] %v802
        %842 = vst [vmem:[%s180 + $0x8] sm:$0xff] %v804
        %843 = vst [vmem:[%s180 + $0x10] sm:$0xff] %v807
        %844 = vst [vmem:[%s180 + $0x18] sm:$0xff] %v809
        %845 = vst [vmem:[%s180 + $0x20] sm:$0xff] %v812
        %846 = vst [vmem:[%s180 + $0x28] sm:$0xff] %v814
        %847 = vst [vmem:[%s180 + $0x30] sm:$0xff] %v817
        %848 = vst [vmem:[%s180 + $0x38] sm:$0xff] %v819
        %849 = vst [vmem:[%s180 + $0x40] sm:$0xff] %v822
        %850 = vst [vmem:[%s180 + $0x48] sm:$0xff] %v824
        %851 = vst [vmem:[%s180 + $0x50] sm:$0xff] %v827
        %852 = vst [vmem:[%s180 + $0x58] sm:$0xff] %v829
        %853 = vst [vmem:[%s180 + $0x60] sm:$0xff] %v832
        %854 = vst [vmem:[%s180 + $0x68] sm:$0xff] %v834
        %855 = vst [vmem:[%s180 + $0x70] sm:$0xff] %v837
        %856 = vst [vmem:[%s180 + $0x78] sm:$0xff] %v839
        %s857 = sand.u32 %s71, 1
        %s858 = scalar_lea.sflag [#allocation4], %s857
        %s859 = sand.u32 %s71, 1
        %s860 = smul.addr %s859, 128
        %s861 = scalar_lea.vmem [#allocation3], %s860
        // Predicated region
        $region67: #{tpu_custom_call.1} parent=61 // pred_check
          %p862 = pneg %p81
        $region68: #{tpu_custom_call.1} parent=61 // pred_check_branch
          %864 = sbr.rel (%p862) target = $region70
        $region69: #{tpu_custom_call.1} parent=61 // pred_region
          %866 = vsyncadd %s858, 0
          %s867 = smul.addr %s16, 8
          %s868 = scalar_lea.hbm %s2, %s867
          %s869 = sshll.u32 %s861, 4
          %s870 = int_to_ptr.vmem [resolvable:$true] %s869
          %s871 = sshll.u32 %s868, 4
          %s872 = int_to_ptr.hbm [resolvable:$true] %s871
          %877 = dma.vmem_to_hbm [thread:$0]  %s870, 2048, %s872, %s858, 128, 256, 8
        $region70: #{tpu_custom_call.1} parent=61 // pred_fallthru
          _
      $region62: #{tpu_custom_call.1} parent=5 // pred_fallthru
        _
      %p878 = scmp.le.s32.totalorder 2, %s11
      // Predicated region
      $region71: #{tpu_custom_call.1} parent=5 // pred_check
        %p879 = pneg %p878
      $region72: #{tpu_custom_call.1} parent=5 // pred_check_branch
        %881 = sbr.rel (%p879) target = $region74
      $region73: #{tpu_custom_call.1} parent=5 // pred_region
        %s882 = ssub.s32 %s11, 2
        // Predicated region
        $region75: #{tpu_custom_call.1} parent=73 // pred_check
          %p883 = pneg %p87
        $region76: #{tpu_custom_call.1} parent=73 // pred_check_branch
          %885 = sbr.rel (%p883) target = $region78
        $region77: #{tpu_custom_call.1} parent=73 // pred_region
          %s886 = sand.u32 %s72, 1
          %s887 = scalar_lea.sflag [#allocation4], %s886
          %s888 = sand.u32 %s72, 1
          %s889 = smul.addr %s888, 128
          %s890 = scalar_lea.vmem [#allocation3], %s889
          %892 = dma.done %s887, 2048
        $region78: #{tpu_custom_call.1} parent=73 // pred_fallthru
          _
      $region74: #{tpu_custom_call.1} parent=5 // pred_fallthru
        _
    $region6: #{tpu_custom_call.1} parent=1 // loop_footer
      %s15 = sadd.s32 1, %s11
    $region7: #{tpu_custom_call.1} parent=1 // loop_footer_branch
      %10 = sbr.rel target = $region3
    $region8: #{tpu_custom_call.1} parent=1 // loop_exit
      _
    %893 = vsyncpa [#allocation4], 1
    %s894 = scalar_lea.sflag [#allocation4], 1
    %895 = vsyncpa %s894, 1

</llo_original>
